<compile_context>
chip_gen: v7x
topology: tpu7x:2x2x1
jax: 0.10.0
libtpu: 0.0.40
codegen_flags: <defaults>
</compile_context>

<pallas_src>
import math
from functools import partial

import jax
import jax.numpy as jnp
from jax.experimental import pallas as pl
from jax.experimental.pallas import tpu as pltpu


_VMEM_LIMIT = 48 * 1024 * 1024   # safe on v5e/v6e (128MiB) and v7x (64MiB)


# ----------------------------------------------------------------------------
# small helpers
# ----------------------------------------------------------------------------

def _ceil_to(x, m):
    return ((x + m - 1) // m) * m


def _row_chunk(rows, width, cap=4 * 1024 * 1024):
    """Pick a row-chunk that divides `rows`, is a multiple of 8, and fits."""
    if rows * width * 4 <= cap:
        return rows
    for c in (512, 256, 128, 64, 32, 16, 8):
        if rows % c == 0 and c * width * 4 <= cap:
            return c
    return rows


def _lane_shape(n_elems):
    """Reshape target for fully lane-dense elementwise kernels."""
    for w in (512, 256, 128):
        if n_elems % w == 0:
            return (n_elems // w, w)
    return (1, n_elems)


def _apply_act(y, act):
    if act == 'relu':
        return jnp.maximum(y, 0.0)
    if act == 'leaky':
        return jnp.where(y >= 0, y, 0.2 * y)
    if act == 'sigmoid':
        return jax.nn.sigmoid(y)
    return y


# ----------------------------------------------------------------------------
# Pallas kernels
# ----------------------------------------------------------------------------

def _mm_kernel(a_ref, b_ref, bias_ref, o_ref, *, act):
    y = jnp.dot(a_ref[...], b_ref[...], preferred_element_type=jnp.float32)
    y = y + bias_ref[...]
    o_ref[...] = _apply_act(y, act).astype(o_ref.dtype)


def _mm_kernel_kacc(a_ref, b_ref, bias_ref, o_ref, acc_ref, *, act):
    @pl.when(pl.program_id(2) == 0)
    def _():
        acc_ref[...] = jnp.zeros_like(acc_ref)

    acc_ref[...] += jnp.dot(a_ref[...], b_ref[...],
                            preferred_element_type=jnp.float32)

    @pl.when(pl.program_id(2) == pl.num_programs(2) - 1)
    def _():
        o_ref[...] = _apply_act(acc_ref[...] + bias_ref[...], act).astype(o_ref.dtype)


def pallas_matmul(a, b, bias, act='none'):
    """(M,K)@(K,N) + bias[N] (+ fused activation) on the MXU, f32 accumulate."""
    M, K = a.shape
    K2, N = b.shape
    assert K == K2
    a = a.astype(jnp.bfloat16)
    b = b.astype(jnp.bfloat16)
    bias2 = bias.reshape(1, N).astype(jnp.float32)

    # tiny-K guard (only the very first 1x1 conv from img_ch=1 hits this)
    if K < 8:
        a = jnp.pad(a, ((0, 0), (0, 8 - K)))
        b = jnp.pad(b, ((0, 8 - K), (0, 0)))
        K = 8

    # --- N tiling (output channels are small here: full-extent block) ---
    n_pad = 0
    if N <= 512:
        tn = N
    elif N % 256 == 0:
        tn = 256
    elif N % 128 == 0:
        tn = 128
    else:
        tn = 128
        n_pad = _ceil_to(N, 128) - N
        b = jnp.pad(b, ((0, 0), (0, n_pad)))
        bias2 = jnp.pad(bias2, ((0, 0), (0, n_pad)))
    Np = N + n_pad

    # --- M tiling (prefer big lane/sublane-dense tiles, avoid padded copies) ---
    m_pad = 0
    if M <= 512:
        tm = M
    else:
        tm = None
        for t in (512, 256, 128, 64, 32, 16, 8):
            if M % t == 0:
                tm = t
                break
        if tm is None:
            tm = 256
            m_pad = _ceil_to(M, 256) - M
            a = jnp.pad(a, ((0, m_pad), (0, 0)))
    Mp = M + m_pad

    if K <= 2048:
        # Full-extent K block: no K grid axis, no accumulator scratch.
        out = pl.pallas_call(
            partial(_mm_kernel, act=act),
            out_shape=jax.ShapeDtypeStruct((Mp, Np), jnp.float32),
            grid=(Mp // tm, Np // tn),
            in_specs=[pl.BlockSpec((tm, K), lambda i, j: (i, 0)),
                      pl.BlockSpec((K, tn), lambda i, j: (0, j)),
                      pl.BlockSpec((1, tn), lambda i, j: (0, j))],
            out_specs=pl.BlockSpec((tm, tn), lambda i, j: (i, j)),
            compiler_params=pltpu.CompilerParams(
                dimension_semantics=("parallel", "parallel"),
                vmem_limit_bytes=_VMEM_LIMIT),
        )(a, b, bias2)
    else:
        tk = 512
        k_pad = _ceil_to(K, tk) - K
        if k_pad:
            a = jnp.pad(a, ((0, 0), (0, k_pad)))
            b = jnp.pad(b, ((0, k_pad), (0, 0)))
        Kp = K + k_pad
        out = pl.pallas_call(
            partial(_mm_kernel_kacc, act=act),
            out_shape=jax.ShapeDtypeStruct((Mp, Np), jnp.float32),
            grid=(Mp // tm, Np // tn, Kp // tk),
            in_specs=[pl.BlockSpec((tm, tk), lambda i, j, kk: (i, kk)),
                      pl.BlockSpec((tk, tn), lambda i, j, kk: (kk, j)),
                      pl.BlockSpec((1, tn), lambda i, j, kk: (0, j))],
            out_specs=pl.BlockSpec((tm, tn), lambda i, j, kk: (i, j)),
            scratch_shapes=[pltpu.VMEM((tm, tn), jnp.float32)],
            compiler_params=pltpu.CompilerParams(
                dimension_semantics=("parallel", "parallel", "arbitrary"),
                vmem_limit_bytes=_VMEM_LIMIT),
        )(a, b, bias2)

    if m_pad or n_pad:
        out = out[:M, :N]
    return out


def _gn_body(x, g, b, d_true, eps, act):
    x = x.astype(jnp.float32)
    mean = jnp.sum(x, axis=-1, keepdims=True) * (1.0 / d_true)
    xc = x - mean
    var = jnp.sum(xc * xc, axis=-1, keepdims=True) * (1.0 / d_true)
    y = xc * jax.lax.rsqrt(var + eps)
    y = y * g + b
    return _apply_act(y, act)


def _gn_kernel(x_ref, g_ref, b_ref, o_ref, *, d_true, eps, act):
    o_ref[...] = _gn_body(x_ref[...], g_ref[...], b_ref[...],
                          d_true, eps, act).astype(o_ref.dtype)


def _gn_add_kernel(x_ref, y_ref, g_ref, b_ref, o_ref, *, d_true, eps, act):
    s = x_ref[...].astype(jnp.float32) + y_ref[...].astype(jnp.float32)
    o_ref[...] = _gn_body(s, g_ref[...], b_ref[...],
                          d_true, eps, act).astype(o_ref.dtype)


def _gn_pallas(kern, xs, g_row, b_row, act, eps):
    N, D = xs[0].shape
    rc = _row_chunk(N, D)
    x_spec = pl.BlockSpec((rc, D), lambda i: (i, 0))
    a_spec = pl.BlockSpec((1, D), lambda i: (0, 0))
    return pl.pallas_call(
        partial(kern, d_true=float(D), eps=eps, act=act),
        out_shape=jax.ShapeDtypeStruct((N, D), jnp.float32),
        grid=(N // rc,),
        in_specs=[x_spec] * len(xs) + [a_spec, a_spec],
        out_specs=x_spec,
        compiler_params=pltpu.CompilerParams(
            dimension_semantics=("parallel",),
            vmem_limit_bytes=_VMEM_LIMIT),
    )(*xs, g_row, b_row)


def group_norm_act(x, gp, act='none', x_add=None, eps=1e-5):
    """GroupNorm(1, C) on NHWC + per-channel affine + activation, fused."""
    N, H, W, C = x.shape
    D = H * W * C
    g_row = jnp.tile(gp['g'], H * W).reshape(1, D)
    b_row = jnp.tile(gp['b'], H * W).reshape(1, D)
    x2 = x.reshape(N, D)
    if x_add is None:
        y2 = _gn_pallas(_gn_kernel, [x2], g_row, b_row, act, eps)
    else:
        y2 = _gn_pallas(_gn_add_kernel, [x2, x_add.reshape(N, D)],
                        g_row, b_row, act, eps)
    return y2.reshape(N, H, W, C)


def _lstm_gate_kernel(i_ref, f_ref, o_ref, g_ref, c_ref, h_out, c_out):
    i = jax.nn.sigmoid(i_ref[...])
    f = jax.nn.sigmoid(f_ref[...])
    o = jax.nn.sigmoid(o_ref[...])
    g = jnp.tanh(g_ref[...])
    c = f * c_ref[...] + i * g
    c_out[...] = c
    h_out[...] = o * jnp.tanh(c)


def pallas_lstm_gates(gates, c_prev):
    """Fused ConvLSTM gate nonlinearities + cell update (lane-dense layout)."""
    Bn, H, W, C4 = gates.shape
    hid = C4 // 4
    parts = [gates[..., k * hid:(k + 1) * hid] for k in range(4)] + [c_prev]
    E = Bn * H * W * hid
    R, Dw = _lane_shape(E)
    args = [p.reshape(R, Dw) for p in parts]
    rc = _row_chunk(R, Dw)
    spec = pl.BlockSpec((rc, Dw), lambda i: (i, 0))
    h2, c2 = pl.pallas_call(
        _lstm_gate_kernel,
        out_shape=(jax.ShapeDtypeStruct((R, Dw), jnp.float32),
                   jax.ShapeDtypeStruct((R, Dw), jnp.float32)),
        grid=(R // rc,),
        in_specs=[spec] * 5,
        out_specs=(spec, spec),
        compiler_params=pltpu.CompilerParams(
            dimension_semantics=("parallel",),
            vmem_limit_bytes=_VMEM_LIMIT),
    )(*args)
    shp = (Bn, H, W, hid)
    return h2.reshape(shp), c2.reshape(shp)


# ----------------------------------------------------------------------------
# Conv building blocks (NHWC, im2col glue + Pallas matmul hot path)
# ----------------------------------------------------------------------------

@partial(jax.jit, static_argnames=('k', 'stride', 'pad', 'act'))
def _conv2d_impl(x, w, bvec, *, k, stride, pad, act):
    """x: (N,H,W,C) NHWC; w: (k*k*C, Cout) with rows ordered (di, dj, c)."""
    N, H, W, C = x.shape
    Cout = w.shape[1]
    x = x.astype(jnp.bfloat16)
    if pad:
        x = jnp.pad(x, ((0, 0), (pad, pad), (pad, pad), (0, 0)))
    Hp, Wp = x.shape[1], x.shape[2]
    Ho = (Hp - k) // stride + 1
    Wo = (Wp - k) // stride + 1
    if k == 1 and stride == 1:
        A = x.reshape(N * Ho * Wo, C)
    else:
        cols = []
        for di in range(k):
            for dj in range(k):
                cols.append(x[:, di:di + stride * (Ho - 1) + 1:stride,
                                 dj:dj + stride * (Wo - 1) + 1:stride, :])
        A = jnp.concatenate(cols, axis=-1).reshape(N * Ho * Wo, k * k * C)
    out = pallas_matmul(A, w, bvec, act=act)
    return out.reshape(N, Ho, Wo, Cout)


def conv2d_nhwc(x, cp, act='none'):
    return _conv2d_impl(x, cp['w'], cp['b'], k=cp['k'], stride=cp['stride'],
                        pad=cp['pad'], act=act)


def maxpool2d(x, k, s):
    # TODO(synk): max-pool kept as lax.reduce_window glue (no matmul hot path).
    return jax.lax.reduce_window(x, -jnp.inf, jax.lax.max,
                                 (1, k, k, 1), (1, s, s, 1), 'VALID')


def resnet_block(x, p):
    h = conv2d_nhwc(x, p['conv1'])
    h = group_norm_act(h, p['norm1'], act='relu')
    h = conv2d_nhwc(h, p['conv2'])
    h = group_norm_act(h, p['norm2'], act='none')
    sk = x if p['skip'] is None else conv2d_nhwc(x, p['skip'])
    return jax.nn.relu(h + sk)


# ---- 5-D (B, T, H, W, C) wrappers -------------------------------------------

def _flatten_time(x5):
    b, t = x5.shape[:2]
    return x5.reshape((b * t,) + x5.shape[2:]), b, t


def apply_tconv(x5, cp, act='none'):                      # TemporalConv2d
    x4, b, t = _flatten_time(x5)
    y = conv2d_nhwc(x4, cp, act=act)
    return y.reshape((b, t) + y.shape[1:])


def apply_tnorm(x5, gp):                                  # TemporalNorm2d(1, C)
    x4, b, t = _flatten_time(x5)
    y = group_norm_act(x4, gp, act='none')
    return y.reshape(x5.shape)


def apply_dcconv(x5, p):                                  # DcConv / DcUpConv
    x4, b, t = _flatten_time(x5)
    cp = p['conv']
    if cp['kind'] == 'subpix2':
        # stride-2 transposed conv via sub-pixel weight split (no zero dilation)
        y = conv2d_nhwc(x4, cp)                           # (n, h, w, 4*cout)
        n, h, w, c4 = y.shape
        co = c4 // 4
        y = y.reshape(n, h, w, 2, 2, co).transpose(0, 1, 3, 2, 4, 5)
        y = y.reshape(n, 2 * h, 2 * w, co)
    elif cp['kind'] == 'dilate':
        # TODO(synk): generic strided transposed conv fallback (unused here).
        s = cp['stride']
        n, h, w, c = x4.shape
        xd = jnp.zeros((n, (h - 1) * s + 1, (w - 1) * s + 1, c), x4.dtype)
        xd = xd.at[:, ::s, ::s, :].set(x4)
        y = _conv2d_impl(xd, cp['w'], cp['b'], k=cp['k'], stride=1,
                         pad=cp['pad'], act='none')
    else:
        y = conv2d_nhwc(x4, cp)
    y = group_norm_act(y, p['norm'], act='leaky')
    return y.reshape((b, t) + y.shape[1:])


def apply_init_net(ctx5, p):
    h = apply_dcconv(ctx5, p['dc'])
    h = apply_tconv(h, p['tc'])
    return apply_tnorm(h, p['tn'])


def apply_convlstm(x5, state, p):
    """ConvLSTM over time: batched x->gates conv, per-step h conv + fused gates."""
    h, c = state
    b, t = x5.shape[:2]
    x4 = x5.reshape((b * t,) + x5.shape[2:])
    gx = conv2d_nhwc(x4, p['wx'])                         # input path for all T at once
    gx = gx.reshape((b, t) + gx.shape[1:])
    outs = []
    for ti in range(t):
        gh = conv2d_nhwc(h, p['wh'])                      # hidden path per step
        gates = group_norm_act(gx[:, ti], p['norm'], act='none', x_add=gh)
        h, c = pallas_lstm_gates(gates, c)
        outs.append(h)
    return jnp.stack(outs, axis=1)


# ----------------------------------------------------------------------------
# Architecture + deterministic parameter init
# ----------------------------------------------------------------------------

def vrnn_arch(n_hid, n_z, img_ch):
    arch = {}
    fe = {'in_ch': [img_ch] + [n_hid * i for i in [1, 2, 4, 8, 8]],
          'out_ch': [n_hid * i for i in [1, 2, 4, 8, 8, 8]],
          'first_conv': [True, False, False, False, False, False],
          'pool_ksize': [None, 2, 2, 2, 2, 4],
          'pool_stride': [None, 2, 2, 2, 2, 1]}
    arch['frame_emb'] = fe
    rd = {'in_ch': [n_hid * i for i in [8, 8, 8, 4, 2, 1]],
          'hid_ch': [n_hid * i for i in [8, 8, 8, 4, 2, 1]],
          'out_ch': [n_hid * i for i in [8, 8, 4, 2, 1, 1]],
          'ksize': [4, 4, 4, 4, 4, 4],
          'stride': [1, 2, 2, 2, 2, 2],
          'padding': [0, 1, 1, 1, 1, 1],
          'upsample': [True, True, True, True, True, False],
          'latent_idx': [0, None, 1, None, 2, None]}
    arch['renderer'] = rd
    la = {'in_ch': [n_hid * 8, n_hid * 8, n_hid * 2],
          'hid_ch': [n_hid * 8, n_hid * 8, n_hid * 2],
          'out_ch': [n_z, n_hid * 8, n_hid * 2]}
    ctx_idx = [i for i, j in enumerate(reversed(rd['latent_idx'])) if j is not None]
    la['ctx_idx'] = list(reversed(ctx_idx))
    la['resolution'] = [1, 8, 32]
    arch['latent'] = la
    return arch


_key = [jax.random.PRNGKey(0)]


def _nk():
    _key[0], k = jax.random.split(_key[0])
    return k


def conv_param(cin, cout, k, stride=1, pad=0):
    std = 1.0 / math.sqrt(cin * k * k)
    w = std * jax.random.normal(_nk(), (k * k * cin, cout), jnp.float32)
    b = std * jax.random.normal(_nk(), (cout,), jnp.float32)
    return {'kind': 'conv', 'w': w.astype(jnp.bfloat16), 'b': b,
            'k': k, 'stride': stride, 'pad': pad}


def deconv_param(cin, cout, k, stride, pad):
    std = 1.0 / math.sqrt(cin * k * k)
    w_t = std * jax.random.normal(_nk(), (k, k, cin, cout), jnp.float32)
    bias = std * jax.random.normal(_nk(), (cout,), jnp.float32)
    if stride == 1:
        wf = w_t[::-1, ::-1, :, :].reshape(k * k * cin, cout)
        return {'kind': 'conv', 'w': wf.astype(jnp.bfloat16), 'b': bias,
                'k': k, 'stride': 1, 'pad': k - 1 - pad}
    if stride == 2 and k == 4 and pad == 1:
        # sub-pixel split: one 3x3 conv producing 4 output phases
        wc = jnp.zeros((3, 3, cin, 4, cout), jnp.float32)
        for a in range(2):
            for b2 in range(2):
                for r in range(3):
                    kh = a + 3 - 2 * r
                    if not 0 <= kh < k:
                        continue
                    for cc in range(3):
                        kw = b2 + 3 - 2 * cc
                        if not 0 <= kw < k:
                            continue
                        wc = wc.at[r, cc, :, a * 2 + b2, :].set(w_t[kh, kw])
        w_mat = wc.reshape(9 * cin, 4 * cout)
        return {'kind': 'subpix2', 'w': w_mat.astype(jnp.bfloat16),
                'b': jnp.tile(bias, 4), 'k': 3, 'stride': 1, 'pad': 1}
    # generic fallback (unused for this architecture)
    wf = w_t[::-1, ::-1, :, :].reshape(k * k * cin, cout)
    return {'kind': 'dilate', 'w': wf.astype(jnp.bfloat16), 'b': bias,
            'k': k, 'stride': stride, 'pad': k - 1 - pad}


def norm_param(c):
    return {'g': jnp.ones((c,), jnp.float32), 'b': jnp.zeros((c,), jnp.float32)}


def resnet_param(cin, cout):
    return {'conv1': conv_param(cin, cout, 3, 1, 1), 'norm1': norm_param(cout),
            'conv2': conv_param(cout, cout, 3, 1, 1), 'norm2': norm_param(cout),
            'skip': conv_param(cin, cout, 1, 1, 0) if cin != cout else None}


def convlstm_param(cin, hid):
    wx = conv_param(cin, 4 * hid, 3, 1, 1)
    wh = conv_param(hid, 4 * hid, 3, 1, 1)
    wh['b'] = jnp.zeros((4 * hid,), jnp.float32)          # single bias on x path
    return {'wx': wx, 'wh': wh, 'norm': norm_param(4 * hid)}


def dcconv_param(cin, cout, k, stride=1, pad=0):
    return {'conv': conv_param(cin, cout, k, stride, pad), 'norm': norm_param(cout)}


def init_params(arch, img_ch, n_ctx, n_hid, n_z):
    fe, rd, la = arch['frame_emb'], arch['renderer'], arch['latent']
    P = {}

    emb = []
    for i in range(len(fe['in_ch'])):
        blk = {}
        if fe['first_conv'][i]:
            blk['first_conv'] = conv_param(fe['in_ch'][i], fe['out_ch'][i], 1, 1, 0)
            blk['res1'] = None
        else:
            blk['first_conv'] = None
            blk['res1'] = resnet_param(fe['in_ch'][i], fe['out_ch'][i])
        blk['res2'] = resnet_param(fe['out_ch'][i], fe['out_ch'][i])
        emb.append(blk)
    P['emb'] = emb

    render, init_nets = [], []
    for i in range(len(rd['in_ch'])):
        inc, hidc, outc = rd['in_ch'][i], rd['hid_ch'][i], rd['out_ch'][i]
        if rd['latent_idx'][i] is not None:
            inc += la['out_ch'][rd['latent_idx'][i]]
        blk = {'lstm': convlstm_param(inc, hidc)}
        if rd['upsample'][i]:
            blk['up'] = {'conv': deconv_param(hidc, outc, rd['ksize'][i],
                                              rd['stride'][i], rd['padding'][i]),
                         'norm': norm_param(outc)}
        else:
            blk['up'] = dcconv_param(hidc, outc, 3, 1, 1)
        if i == len(rd['in_ch']) - 1:
            blk['final'] = conv_param(n_hid, img_ch, 3, 1, 1)
        render.append(blk)
        init_inc = fe['out_ch'][-(i + 1)]
        init_nets.append({'dc': dcconv_param(init_inc * n_ctx, init_inc * n_ctx, 1),
                          'tc': conv_param(init_inc * n_ctx, hidc * 2, 1, 1, 0),
                          'tn': norm_param(hidc * 2)})
    P['render'], P['init'] = render, init_nets

    prior, post, prior_init, post_init = [], [], [], []
    for i in range(len(la['in_ch'])):
        inc, hidc, outc = la['in_ch'][i], la['hid_ch'][i], la['out_ch'][i]
        prevc = sum(la['out_ch'][:i])

        def lat_net(extra):
            return {'tc1': conv_param(inc, hidc, 1, 1, 0),
                    'tn1': norm_param(hidc),
                    'lstm': convlstm_param(hidc, hidc),
                    'tc2': conv_param(hidc + extra, outc * 2, 1, 1, 0),
                    # final TemporalNorm2d: weight=0, bias ~ N(0, 0.001)
                    'tn2': {'g': jnp.zeros((outc * 2,), jnp.float32),
                            'b': 0.001 * jax.random.normal(_nk(), (outc * 2,), jnp.float32)}}

        def init_net():
            return {'dc': dcconv_param(inc * n_ctx, inc * n_ctx, 1),
                    'tc': conv_param(inc * n_ctx, hidc * 2, 1, 1, 0),
                    'tn': norm_param(hidc * 2)}

        prior.append(lat_net(0))
        post.append(lat_net(prevc))
        prior_init.append(init_net())
        post_init.append(init_net())
    P['prior'], P['post'] = prior, post
    P['prior_init'], P['post_init'] = prior_init, post_init
    return P


# ----------------------------------------------------------------------------
# Model forward (NHWC internally)
# ----------------------------------------------------------------------------

def get_emb(P, x5, arch):
    fe = arch['frame_emb']
    b, t = x5.shape[:2]
    out = x5.reshape((b * t,) + x5.shape[2:])
    skips = []
    for i, blk in enumerate(P['emb']):
        if fe['pool_ksize'][i] is not None:
            out = maxpool2d(out, fe['pool_ksize'][i], fe['pool_stride'][i])
        if blk['first_conv'] is not None:
            out = conv2d_nhwc(out, blk['first_conv'])
        else:
            out = resnet_block(out, blk['res1'])
        out = resnet_block(out, blk['res2'])
        skips.append(out.reshape((b, t) + out.shape[1:]))
    return skips


def _ctx_to_single_frame(cur_ctx):
    # (b, n_ctx, h, w, c) -> (b, 1, h, w, n_ctx*c)   (torch view(b,-1,h,w) analogue)
    b, t, h, w, c = cur_ctx.shape
    ctx = jnp.moveaxis(cur_ctx, 1, 3).reshape(b, h, w, t * c)
    return ctx[:, None]


def latent_branch(P, emb, arch, n_ctx, mode, use_mean=True, scale_var=1.0):
    la = arch['latent']
    nets = P['prior'] if mode == 'prior' else P['post']
    inits = P['prior_init'] if mode == 'prior' else P['post_init']
    dists = []
    for ni in range(len(nets)):
        e = emb[la['ctx_idx'][ni]]
        out = e[:, n_ctx - 1:-1] if mode == 'prior' else e[:, n_ctx:]
        cur_ctx = e[:, :n_ctx]
        p = nets[ni]
        out = apply_tconv(out, p['tc1'])
        out = apply_tnorm(out, p['tn1'])
        st = apply_init_net(_ctx_to_single_frame(cur_ctx), inits[ni])[:, 0]
        h0, c0 = jnp.split(st, 2, axis=-1)
        out = apply_convlstm(out, (h0, c0), p['lstm'])
        if mode == 'post':
            cur_res = la['resolution'][ni]
            prev = []
            for j in range(ni):
                sf = cur_res // la['resolution'][j]
                zp = dists[j][3]
                bb, tt, hh, ww, cc = zp.shape
                zp4 = zp.reshape(bb * tt, hh, ww, cc)
                zp4 = jnp.repeat(jnp.repeat(zp4, sf, axis=1), sf, axis=2)  # nearest
                prev.append(zp4.reshape(bb, tt, zp4.shape[1], zp4.shape[2], cc))
            out = jnp.concatenate(prev + [out], axis=-1)
        out = apply_tconv(out, p['tc2'])
        out = apply_tnorm(out, p['tn2'])
        mean, var = jnp.split(out, 2, axis=-1)
        var = var * scale_var
        logvar = jnp.log(jax.nn.softplus(var))
        # TODO(synk): flows.gaussian_rsample stochastic path omitted; z0 = mean.
        z0 = mean
        dists.append([mean, logvar, z0, z0, None])
    return dists


def render(P, x, zs, emb, arch, n_ctx):
    rd = arch['renderer']
    out = x
    rev_ctx = list(reversed(emb))
    for bi, blk in enumerate(P['render']):
        li = rd['latent_idx'][bi]
        if li is not None:
            out = jnp.concatenate([out, zs[li]], axis=-1)
        cur_ctx = rev_ctx[bi][:, :n_ctx]
        skip = apply_init_net(_ctx_to_single_frame(cur_ctx), P['init'][bi])[:, 0]
        h0, c0 = jnp.split(skip, 2, axis=-1)
        out = apply_convlstm(out, (h0, c0), blk['lstm'])
        out = apply_dcconv(out, blk['up'])
        if 'final' in blk:
            out = apply_tconv(out, blk['final'], act='sigmoid')   # fused sigmoid
    return out


def model_forward(P, frames, arch, config, use_prior=True, use_mean=True, scale_var=1.0):
    n_ctx = config['n_ctx']
    x = jnp.transpose(frames, (0, 1, 3, 4, 2))            # NCHW -> NHWC (once)
    emb = get_emb(P, x, arch)
    q_dists = latent_branch(P, emb, arch, n_ctx, 'post', use_mean, scale_var)
    p_dists = latent_branch(P, emb, arch, n_ctx, 'prior', use_mean, scale_var)
    zs = [d[2] for d in p_dists] if use_prior else [d[3] for d in q_dists]
    preds = render(P, emb[-1][:, n_ctx - 1:-1], zs, emb, arch, n_ctx)

    to_ncthw = lambda a: jnp.transpose(a, (0, 1, 4, 2, 3))
    preds = to_ncthw(preds)
    p_out = [[to_ncthw(d[0]), to_ncthw(d[1]), to_ncthw(d[2]), to_ncthw(d[3]), None]
             for d in p_dists]
    q_out = [[to_ncthw(d[0]), to_ncthw(d[1]), to_ncthw(d[2]), to_ncthw(d[3]), None]
             for d in q_dists]
    return (preds, p_out, q_out), []


# ----------------------------------------------------------------------------
if __name__ == "__main__":
    # Small but architecture-consistent shapes (latent resolutions [1,8,32] need H=W=64).
    img_ch, n_ctx, n_hid, n_z = 1, 2, 8, 4
    B, T, H, W = 1, 4, 64, 64

    arch = vrnn_arch(n_hid, n_z, img_ch)
    P = init_params(arch, img_ch, n_ctx, n_hid, n_z)
    frames = jax.random.uniform(jax.random.PRNGKey(0), (B, T, img_ch, H, W), jnp.float32)
    config = {'n_steps': T - n_ctx, 'n_ctx': n_ctx}

    (preds, p_dists, q_dists), _ = model_forward(P, frames, arch, config,
                                                 use_prior=True, use_mean=True)
    preds = jax.block_until_ready(preds)

    assert preds.shape == (B, T - n_ctx, img_ch, H, W)
    assert bool(jnp.all(jnp.isfinite(preds)))
    print("KERNEL_OK")
</pallas_src>

<mosaic_0001>
module attributes {stable_mosaic.version = 11 : i64} {
  func.func @_mm_kernel(%arg0: i32, %arg1: i32, %arg2: memref<512x8xbf16, #tpu.memory_space<vmem>>, %arg3: memref<8x8xbf16, #tpu.memory_space<vmem>>, %arg4: memref<1x8xf32, #tpu.memory_space<vmem>>, %arg5: memref<512x8xf32, #tpu.memory_space<vmem>>) attributes {dimension_semantics = [#tpu.dimension_semantics<parallel>, #tpu.dimension_semantics<parallel>], iteration_bounds = array<i64: 32, 1>, scalar_prefetch = 0 : i64, scratch_operands = 0 : i64, tpu.core_type = #tpu.core_type<tc>, window_params = [{transform_indices = @transform_0, window_bounds = array<i64: 512, 8>}, {transform_indices = @transform_1, window_bounds = array<i64: 8, 8>}, {transform_indices = @transform_2, window_bounds = array<i64: 1, 8>}, {transform_indices = @transform_3, window_bounds = array<i64: 512, 8>}]} {
    %c0 = arith.constant 0 : index
    %c0_0 = arith.constant 0 : index
    %0 = vector.load %arg2[%c0, %c0_0] : memref<512x8xbf16, #tpu.memory_space<vmem>>, vector<512x8xbf16>
    %c0_1 = arith.constant 0 : index
    %c0_2 = arith.constant 0 : index
    %1 = vector.load %arg3[%c0_1, %c0_2] : memref<8x8xbf16, #tpu.memory_space<vmem>>, vector<8x8xbf16>
    %cst = arith.constant dense<0.000000e+00> : vector<512x8xf32>
    %2 = tpu.matmul %0, %1, %cst {dimension_numbers = #tpu.dot_dimension_numbers<[1], [0], [0], [1], [0, 0, 1, 1], [], []>} : vector<512x8xbf16>, vector<8x8xbf16>, vector<512x8xf32> -> vector<512x8xf32>
    %c0_3 = arith.constant 0 : index
    %c0_4 = arith.constant 0 : index
    %3 = vector.load %arg4[%c0_3, %c0_4] : memref<1x8xf32, #tpu.memory_space<vmem>>, vector<1x8xf32>
    %4 = vector.broadcast %3 : vector<1x8xf32> to vector<512x8xf32>
    %5 = arith.addf %2, %4 : vector<512x8xf32>
    %c0_5 = arith.constant 0 : index
    %c0_6 = arith.constant 0 : index
    %6 = vector.load %arg5[%c0_5, %c0_6] : memref<512x8xf32, #tpu.memory_space<vmem>>, vector<512x8xf32>
    tpu.vector_store %arg5[%c0_5, %c0_6], %5 {strides = array<i32>} : memref<512x8xf32, #tpu.memory_space<vmem>>, vector<512x8xf32>,
    return
  }
  func.func @transform_0(%arg0: i32, %arg1: i32) -> (i32, i32) {
    %c0_i32 = arith.constant 0 : i32
    %c0_i32_0 = arith.constant 0 : i32
    return %arg0, %c0_i32 : i32, i32
  }
  func.func @transform_1(%arg0: i32, %arg1: i32) -> (i32, i32) {
    %c0_i32 = arith.constant 0 : i32
    %c0_i32_0 = arith.constant 0 : i32
    return %c0_i32, %arg1 : i32, i32
  }
  func.func @transform_2(%arg0: i32, %arg1: i32) -> (i32, i32) {
    %c0_i32 = arith.constant 0 : i32
    %c0_i32_0 = arith.constant 0 : i32
    return %c0_i32, %arg1 : i32, i32
  }
  func.func @transform_3(%arg0: i32, %arg1: i32) -> (i32, i32) {
    %c0_i32 = arith.constant 0 : i32
    return %arg0, %arg1 : i32, i32
  }
}

</mosaic_0001>

<llo_original>
// kernel: _conv2d_impl.1
$region0: #{_conv2d_impl.1}
  #allocation0 [shape = 'u32[]', space=smem, size = 0x4, offset = 0x4, fixed_abs, tag = 'smem constant byte address 0x4 - core index']
  #allocation1 [shape = 'u32[144,128]{1,0:T(1,128)}', space=vmem, size = 0x12000, scoped, tag = 'internal scratch']
  %s0 = inlined_call_operand.vmem [shape: bf16[16384,8], index: 0, kind: input, shape index: {}]
  %s1 = inlined_call_operand.vmem [shape: bf16[8,8], index: 1, kind: input, shape index: {}]
  %s2 = inlined_call_operand.vmem [shape: f32[1,8], index: 2, kind: input, shape index: {}]
  %s3 = inlined_call_operand.vmem [shape: f32[16384,8], index: 3, kind: output, shape index: {}]
  %s4 = sld [smem:[#allocation0]]
  $region45: #{_conv2d_impl.1} parent=0
    _
  %s6 = ssub.s32 1, %s4
  %s7 = scalar_select 0, %s6, %s4
  loop: start=0, step=1, limit=34
  $region2: #{_conv2d_impl.1} parent=0 // loop_pre_header
    _
  $region3: #{_conv2d_impl.1} parent=0 // loop_header
    %s9 = sphi 0, %s13
    %p10 = scmp.ge.s32.totalorder %s9, 34
    %s16 = sphi 0, %s28
    %s17 = sphi 0, %s24
    %s18 = sphi 0, %s16
    %s19 = sphi 0, %s17
    %s20 = sphi 0, %s18
    %s21 = sphi 0, %s19
    %s31 = sphi 0, %s33
    %s34 = sphi 0, %s31
    %s35 = sphi 0, %s34
    %s51 = sphi 0, %s35
    %s57 = sphi 0, %s59
    %s60 = sphi 0, %s57
    %s61 = sphi 0, %s60
    %s77 = sphi 0, %s61
    %s83 = sphi 0, %s85
    %s86 = sphi 0, %s83
    %s87 = sphi 0, %s86
    %s103 = sphi 0, %s87
    %s111 = sphi 0, %s113
    %s114 = sphi 0, %s111
    %s115 = sphi 0, %s114
    %s131 = sphi 0, %s115
  $region4: #{_conv2d_impl.1} parent=0 // loop_header_branch
    %12 = sbr.rel (%p10) target = $region8
  $region5: #{_conv2d_impl.1} parent=0 // loop_body
    %s14 = ssub.s32 %s9, 1
    %s15 = ssub.s32 %s9, 2
    %s22 = sadd.s32 1, %s17
    %p23 = scmp.ge.s32.totalorder %s22, 1
    %s24 = scalar_select %p23, 0, %s22
    %s25 = sadd.s32 1, %s16
    %s26 = scalar_select %p23, %s25, %s16
    %p27 = scmp.ge.s32.totalorder %s26, 32
    %s28 = scalar_select %p27, 0, %s26
    %s29 = ssub.s32 %s16, %s28
    %p30 = scmp.eq.s32.totalorder %s29, 0
    %s32 = sadd.s32 %s31, 1
    %s33 = scalar_select %p30, %s31, %s32
    %p36 = pneg %p30
    %p37 = scmp.eq.s32.totalorder %s9, 31
    %p38 = por %p36, %p37
    %p39 = scmp.ne.s32.totalorder %s31, %s34
    %p40 = scmp.eq.s32.totalorder %s9, 0
    %p41 = por %p39, %p40
    %p42 = scmp.ne.s32.totalorder %s31, %s34
    %p43 = scmp.eq.s32.totalorder %s14, 31
    %p44 = por %p42, %p43
    %p45 = scmp.ne.s32.totalorder %s34, %s35
    %p46 = scmp.eq.s32.totalorder %s14, 0
    %p47 = por %p45, %p46
    %p48 = scmp.ne.s32.totalorder %s34, %s35
    %p49 = scmp.eq.s32.totalorder %s15, 31
    %p50 = por %p48, %p49
    %p52 = scmp.ne.s32.totalorder %s35, %s51
    %p53 = scmp.eq.s32.totalorder %s15, 0
    %p54 = por %p52, %p53
    %s55 = ssub.s32 %s17, %s24
    %p56 = scmp.eq.s32.totalorder %s55, 0
    %s58 = sadd.s32 %s57, 1
    %s59 = scalar_select %p56, %s57, %s58
    %p62 = pneg %p56
    %p63 = scmp.eq.s32.totalorder %s9, 31
    %p64 = por %p62, %p63
    %p65 = scmp.ne.s32.totalorder %s57, %s60
    %p66 = scmp.eq.s32.totalorder %s9, 0
    %p67 = por %p65, %p66
    %p68 = scmp.ne.s32.totalorder %s57, %s60
    %p69 = scmp.eq.s32.totalorder %s14, 31
    %p70 = por %p68, %p69
    %p71 = scmp.ne.s32.totalorder %s60, %s61
    %p72 = scmp.eq.s32.totalorder %s14, 0
    %p73 = por %p71, %p72
    %p74 = scmp.ne.s32.totalorder %s60, %s61
    %p75 = scmp.eq.s32.totalorder %s15, 31
    %p76 = por %p74, %p75
    %p78 = scmp.ne.s32.totalorder %s61, %s77
    %p79 = scmp.eq.s32.totalorder %s15, 0
    %p80 = por %p78, %p79
    %s81 = ssub.s32 %s17, %s24
    %p82 = scmp.eq.s32.totalorder %s81, 0
    %s84 = sadd.s32 %s83, 1
    %s85 = scalar_select %p82, %s83, %s84
    %p88 = pneg %p82
    %p89 = scmp.eq.s32.totalorder %s9, 31
    %p90 = por %p88, %p89
    %p91 = scmp.ne.s32.totalorder %s83, %s86
    %p92 = scmp.eq.s32.totalorder %s9, 0
    %p93 = por %p91, %p92
    %p94 = scmp.ne.s32.totalorder %s83, %s86
    %p95 = scmp.eq.s32.totalorder %s14, 31
    %p96 = por %p94, %p95
    %p97 = scmp.ne.s32.totalorder %s86, %s87
    %p98 = scmp.eq.s32.totalorder %s14, 0
    %p99 = por %p97, %p98
    %p100 = scmp.ne.s32.totalorder %s86, %s87
    %p101 = scmp.eq.s32.totalorder %s15, 31
    %p102 = por %p100, %p101
    %p104 = scmp.ne.s32.totalorder %s87, %s103
    %p105 = scmp.eq.s32.totalorder %s15, 0
    %p106 = por %p104, %p105
    %s107 = ssub.s32 %s16, %s28
    %s108 = ssub.s32 %s17, %s24
    %s109 = sor.u32 %s107, %s108
    %p110 = scmp.eq.s32.totalorder %s109, 0
    %s112 = sadd.s32 %s111, 1
    %s113 = scalar_select %p110, %s111, %s112
    %p116 = pneg %p110
    %p117 = scmp.eq.s32.totalorder %s9, 31
    %p118 = por %p116, %p117
    %p119 = scmp.ne.s32.totalorder %s111, %s114
    %p120 = scmp.eq.s32.totalorder %s9, 0
    %p121 = por %p119, %p120
    %p122 = scmp.ne.s32.totalorder %s111, %s114
    %p123 = scmp.eq.s32.totalorder %s14, 31
    %p124 = por %p122, %p123
    %p125 = scmp.ne.s32.totalorder %s114, %s115
    %p126 = scmp.eq.s32.totalorder %s14, 0
    %p127 = por %p125, %p126
    %p128 = scmp.ne.s32.totalorder %s114, %s115
    %p129 = scmp.eq.s32.totalorder %s15, 31
    %p130 = por %p128, %p129
    %p132 = scmp.ne.s32.totalorder %s115, %s131
    %p133 = scmp.eq.s32.totalorder %s15, 0
    %p134 = por %p132, %p133
    %p135 = scmp.le.s32.totalorder 1, %s9
    %p136 = scmp.lt.s32.totalorder %s9, 33
    %p137 = pnand %p135, %p136
    %p138 = pneg %p137
    // Predicated region
    $region9: #{_conv2d_impl.1} parent=5 // pred_check
      _
    $region10: #{_conv2d_impl.1} parent=5 // pred_check_branch
      %140 = sbr.rel (%p137) target = $region12
    $region11: #{_conv2d_impl.1} parent=5 // pred_region
      %s141 = ssub.s32 %s9, 1
      // Predicated region
      $region13: #{_conv2d_impl.1} parent=11 // pred_check
        %p142 = pneg %p73
      $region14: #{_conv2d_impl.1} parent=11 // pred_check_branch
        %144 = sbr.rel (%p142) target = $region16
      $region15: #{_conv2d_impl.1} parent=11 // pred_region
        %p145 = scmp.lt.s32.totalorder %s19, 0
        %s146 = scalar_select %p145, %s19, 0
        %s147 = smul.addr %s146, 4
        %s148 = scalar_lea.vmem %s1, %s147
      $region16: #{_conv2d_impl.1} parent=11 // pred_fallthru
        _
      // Predicated region
      $region17: #{_conv2d_impl.1} parent=11 // pred_check
        %p149 = pneg %p99
      $region18: #{_conv2d_impl.1} parent=11 // pred_check_branch
        %151 = sbr.rel (%p149) target = $region20
      $region19: #{_conv2d_impl.1} parent=11 // pred_region
        %p152 = scmp.lt.s32.totalorder %s19, 0
        %s153 = scalar_select %p152, %s19, 0
        %s154 = scalar_lea.vmem %s2, %s153
      $region20: #{_conv2d_impl.1} parent=11 // pred_fallthru
        _
    $region12: #{_conv2d_impl.1} parent=5 // pred_fallthru
      _
    %p155 = scmp.lt.s32.totalorder %s9, 32
    // Predicated region
    $region21: #{_conv2d_impl.1} parent=5 // pred_check
      %p156 = pneg %p155
    $region22: #{_conv2d_impl.1} parent=5 // pred_check_branch
      %158 = sbr.rel (%p156) target = $region24
    $region23: #{_conv2d_impl.1} parent=5 // pred_region
      // Predicated region
      $region25: #{_conv2d_impl.1} parent=23 // pred_check
        %p159 = pneg %p41
      $region26: #{_conv2d_impl.1} parent=23 // pred_check_branch
        %161 = sbr.rel (%p159) target = $region28
      $region27: #{_conv2d_impl.1} parent=23 // pred_region
        %s162 = smul.u32 64, %s16
        %p163 = scmp.lt.s32.totalorder %s162, 2047
        %s164 = scalar_select %p163, %s162, 2047
        %s165 = smul.addr %s164, 4
        %s166 = scalar_lea.vmem %s0, %s165
        %s167 = smul.u32 64, %s16
      $region28: #{_conv2d_impl.1} parent=23 // pred_fallthru
        _
    $region24: #{_conv2d_impl.1} parent=5 // pred_fallthru
      _
    %p168 = scmp.le.s32.totalorder 1, %s9
    %p169 = scmp.lt.s32.totalorder %s9, 33
    %p170 = pnand %p168, %p169
    %p171 = pneg %p170
    // Predicated region
    $region29: #{_conv2d_impl.1} parent=5 // pred_check
      _
    $region30: #{_conv2d_impl.1} parent=5 // pred_check_branch
      %173 = sbr.rel (%p170) target = $region32
    $region31: #{_conv2d_impl.1} parent=5 // pred_region
      %s174 = ssub.s32 %s9, 1
      %s175 = smul.u32 64, %s18
      %p176 = scmp.lt.s32.totalorder %s175, 2047
      %s177 = scalar_select %p176, %s175, 2047
      %s178 = smul.addr %s177, 4
      %s179 = scalar_lea.vmem %s0, %s178
      %p180 = pneg %p47
      %p181 = pneg %p44
      %p182 = scmp.lt.s32.totalorder %s19, 0
      %s183 = scalar_select %p182, %s19, 0
      %s184 = smul.addr %s183, 4
      %s185 = scalar_lea.vmem %s1, %s184
      %p186 = pneg %p73
      %p187 = pneg %p70
      %p188 = scmp.lt.s32.totalorder %s19, 0
      %s189 = scalar_select %p188, %s19, 0
      %s190 = scalar_lea.vmem %s2, %s189
      %p191 = pneg %p99
      %p192 = pneg %p96
      %p193 = pneg %p127
      %p194 = pneg %p124
      %s195 = smul.u32 64, %s18
      %p196 = scmp.lt.s32.totalorder %s195, 2047
      %s197 = scalar_select %p196, %s195, 2047
      %p198 = scmp.lt.s32.totalorder %s19, 0
      %s199 = scalar_select %p198, %s19, 0
      %s200 = sadd.s32 %s199, %s197
      %s201 = smul.addr %s200, 8
      %s202 = scalar_lea.vmem %s3, %s201
      %s203 = smul.u32 64, %s18
      %p204 = scmp.lt.s32.totalorder %s203, 2047
      %s205 = scalar_select %p204, %s203, 2047
      %s206 = smul.addr %s205, 4
      %s207 = scalar_lea.vmem %s0, %s206
      %s208 = smul.u32 64, %s18
      %p209 = scmp.lt.s32.totalorder %s19, 0
      %s210 = scalar_select %p209, %s19, 0
      %s211 = smul.addr %s210, 4
      %s212 = scalar_lea.vmem %s1, %s211
      %p213 = scmp.lt.s32.totalorder %s19, 0
      %s214 = scalar_select %p213, %s19, 0
      %s215 = scalar_lea.vmem %s2, %s214
      %s216 = smul.u32 64, %s18
      %p217 = scmp.lt.s32.totalorder %s216, 2047
      %s218 = scalar_select %p217, %s216, 2047
      %p219 = scmp.lt.s32.totalorder %s19, 0
      %s220 = scalar_select %p219, %s19, 0
      %s221 = sadd.s32 %s220, %s218
      %s222 = smul.addr %s221, 8
      %s223 = scalar_lea.vmem %s3, %s222
      %s224 = smul.u32 64, %s18
      %v226 = vld [vmem:[%s207] sm:$0xf]
      %v227 = vld [vmem:[%s207 + $0x4] sm:$0xf]
      %v228 = vld [vmem:[%s207 + $0x8] sm:$0xf]
      %v229 = vld [vmem:[%s207 + $0xc] sm:$0xf]
      %v230 = vld [vmem:[%s207 + $0x10] sm:$0xf]
      %v231 = vld [vmem:[%s207 + $0x14] sm:$0xf]
      %v232 = vld [vmem:[%s207 + $0x18] sm:$0xf]
      %v233 = vld [vmem:[%s207 + $0x1c] sm:$0xf]
      %v234 = vld [vmem:[%s207 + $0x20] sm:$0xf]
      %v235 = vld [vmem:[%s207 + $0x24] sm:$0xf]
      %v236 = vld [vmem:[%s207 + $0x28] sm:$0xf]
      %v237 = vld [vmem:[%s207 + $0x2c] sm:$0xf]
      %v238 = vld [vmem:[%s207 + $0x30] sm:$0xf]
      %v239 = vld [vmem:[%s207 + $0x34] sm:$0xf]
      %v240 = vld [vmem:[%s207 + $0x38] sm:$0xf]
      %v241 = vld [vmem:[%s207 + $0x3c] sm:$0xf]
      %v242 = vld [vmem:[%s207 + $0x40] sm:$0xf]
      %v243 = vld [vmem:[%s207 + $0x44] sm:$0xf]
      %v244 = vld [vmem:[%s207 + $0x48] sm:$0xf]
      %v245 = vld [vmem:[%s207 + $0x4c] sm:$0xf]
      %v246 = vld [vmem:[%s207 + $0x50] sm:$0xf]
      %v247 = vld [vmem:[%s207 + $0x54] sm:$0xf]
      %v248 = vld [vmem:[%s207 + $0x58] sm:$0xf]
      %v249 = vld [vmem:[%s207 + $0x5c] sm:$0xf]
      %v250 = vld [vmem:[%s207 + $0x60] sm:$0xf]
      %v251 = vld [vmem:[%s207 + $0x64] sm:$0xf]
      %v252 = vld [vmem:[%s207 + $0x68] sm:$0xf]
      %v253 = vld [vmem:[%s207 + $0x6c] sm:$0xf]
      %v254 = vld [vmem:[%s207 + $0x70] sm:$0xf]
      %v255 = vld [vmem:[%s207 + $0x74] sm:$0xf]
      %v256 = vld [vmem:[%s207 + $0x78] sm:$0xf]
      %v257 = vld [vmem:[%s207 + $0x7c] sm:$0xf]
      %v258 = vld [vmem:[%s207 + $0x80] sm:$0xf]
      %v259 = vld [vmem:[%s207 + $0x84] sm:$0xf]
      %v260 = vld [vmem:[%s207 + $0x88] sm:$0xf]
      %v261 = vld [vmem:[%s207 + $0x8c] sm:$0xf]
      %v262 = vld [vmem:[%s207 + $0x90] sm:$0xf]
      %v263 = vld [vmem:[%s207 + $0x94] sm:$0xf]
      %v264 = vld [vmem:[%s207 + $0x98] sm:$0xf]
      %v265 = vld [vmem:[%s207 + $0x9c] sm:$0xf]
      %v266 = vld [vmem:[%s207 + $0xa0] sm:$0xf]
      %v267 = vld [vmem:[%s207 + $0xa4] sm:$0xf]
      %v268 = vld [vmem:[%s207 + $0xa8] sm:$0xf]
      %v269 = vld [vmem:[%s207 + $0xac] sm:$0xf]
      %v270 = vld [vmem:[%s207 + $0xb0] sm:$0xf]
      %v271 = vld [vmem:[%s207 + $0xb4] sm:$0xf]
      %v272 = vld [vmem:[%s207 + $0xb8] sm:$0xf]
      %v273 = vld [vmem:[%s207 + $0xbc] sm:$0xf]
      %v274 = vld [vmem:[%s207 + $0xc0] sm:$0xf]
      %v275 = vld [vmem:[%s207 + $0xc4] sm:$0xf]
      %v276 = vld [vmem:[%s207 + $0xc8] sm:$0xf]
      %v277 = vld [vmem:[%s207 + $0xcc] sm:$0xf]
      %v278 = vld [vmem:[%s207 + $0xd0] sm:$0xf]
      %v279 = vld [vmem:[%s207 + $0xd4] sm:$0xf]
      %v280 = vld [vmem:[%s207 + $0xd8] sm:$0xf]
      %v281 = vld [vmem:[%s207 + $0xdc] sm:$0xf]
      %v282 = vld [vmem:[%s207 + $0xe0] sm:$0xf]
      %v283 = vld [vmem:[%s207 + $0xe4] sm:$0xf]
      %v284 = vld [vmem:[%s207 + $0xe8] sm:$0xf]
      %v285 = vld [vmem:[%s207 + $0xec] sm:$0xf]
      %v286 = vld [vmem:[%s207 + $0xf0] sm:$0xf]
      %v287 = vld [vmem:[%s207 + $0xf4] sm:$0xf]
      %v288 = vld [vmem:[%s207 + $0xf8] sm:$0xf]
      %v289 = vld [vmem:[%s207 + $0xfc] sm:$0xf]
      %v290 = vld [vmem:[%s212] sm:$0xf]
      %v291 = vld [vmem:[%s215] sm:$0x1]
      %v293 = vlaneseq
      %v294 = vshrl.u32 %v293, 7
      %v295 = vsub.s32 0, %v294
      %v296 = vrot.slane %v291, %v295
      %v362 = vunpack.c.l.b16 %v226
      %v363 = vunpack.c.l.b16 %v227
      %v364 = vunpack.c.l.b16 %v228
      %v365 = vunpack.c.l.b16 %v229
      %v366 = vunpack.c.l.b16 %v230
      %v367 = vunpack.c.l.b16 %v231
      %v368 = vunpack.c.l.b16 %v232
      %v369 = vunpack.c.l.b16 %v233
      %v370 = vunpack.c.l.b16 %v234
      %v371 = vunpack.c.l.b16 %v235
      %v372 = vunpack.c.l.b16 %v236
      %v373 = vunpack.c.l.b16 %v237
      %v374 = vunpack.c.l.b16 %v238
      %v375 = vunpack.c.l.b16 %v239
      %v376 = vunpack.c.l.b16 %v240
      %v377 = vunpack.c.l.b16 %v241
      %v378 = vunpack.c.l.b16 %v242
      %v379 = vunpack.c.l.b16 %v243
      %v380 = vunpack.c.l.b16 %v244
      %v381 = vunpack.c.l.b16 %v245
      %v382 = vunpack.c.l.b16 %v246
      %v383 = vunpack.c.l.b16 %v247
      %v384 = vunpack.c.l.b16 %v248
      %v385 = vunpack.c.l.b16 %v249
      %v386 = vunpack.c.l.b16 %v250
      %v387 = vunpack.c.l.b16 %v251
      %v388 = vunpack.c.l.b16 %v252
      %v389 = vunpack.c.l.b16 %v253
      %v390 = vunpack.c.l.b16 %v254
      %v391 = vunpack.c.l.b16 %v255
      %v392 = vunpack.c.l.b16 %v256
      %v393 = vunpack.c.l.b16 %v257
      %v394 = vunpack.c.l.b16 %v258
      %v395 = vunpack.c.l.b16 %v259
      %v396 = vunpack.c.l.b16 %v260
      %v397 = vunpack.c.l.b16 %v261
      %v398 = vunpack.c.l.b16 %v262
      %v399 = vunpack.c.l.b16 %v263
      %v400 = vunpack.c.l.b16 %v264
      %v401 = vunpack.c.l.b16 %v265
      %v402 = vunpack.c.l.b16 %v266
      %v403 = vunpack.c.l.b16 %v267
      %v404 = vunpack.c.l.b16 %v268
      %v405 = vunpack.c.l.b16 %v269
      %v406 = vunpack.c.l.b16 %v270
      %v407 = vunpack.c.l.b16 %v271
      %v408 = vunpack.c.l.b16 %v272
      %v409 = vunpack.c.l.b16 %v273
      %v410 = vunpack.c.l.b16 %v274
      %v411 = vunpack.c.l.b16 %v275
      %v412 = vunpack.c.l.b16 %v276
      %v413 = vunpack.c.l.b16 %v277
      %v414 = vunpack.c.l.b16 %v278
      %v415 = vunpack.c.l.b16 %v279
      %v416 = vunpack.c.l.b16 %v280
      %v417 = vunpack.c.l.b16 %v281
      %v418 = vunpack.c.l.b16 %v282
      %v419 = vunpack.c.l.b16 %v283
      %v420 = vunpack.c.l.b16 %v284
      %v421 = vunpack.c.l.b16 %v285
      %v422 = vunpack.c.l.b16 %v286
      %v423 = vunpack.c.l.b16 %v287
      %v424 = vunpack.c.l.b16 %v288
      %v425 = vunpack.c.l.b16 %v289
      %v426 = vpack.c.b16 %v363, %v362
      %v427 = vpack.c.b16 %v365, %v364
      %v428 = vpack.c.b16 %v367, %v366
      %v429 = vpack.c.b16 %v369, %v368
      %v430 = vpack.c.b16 %v371, %v370
      %v431 = vpack.c.b16 %v373, %v372
      %v432 = vpack.c.b16 %v375, %v374
      %v433 = vpack.c.b16 %v377, %v376
      %v434 = vpack.c.b16 %v379, %v378
      %v435 = vpack.c.b16 %v381, %v380
      %v436 = vpack.c.b16 %v383, %v382
      %v437 = vpack.c.b16 %v385, %v384
      %v438 = vpack.c.b16 %v387, %v386
      %v439 = vpack.c.b16 %v389, %v388
      %v440 = vpack.c.b16 %v391, %v390
      %v441 = vpack.c.b16 %v393, %v392
      %v442 = vpack.c.b16 %v395, %v394
      %v443 = vpack.c.b16 %v397, %v396
      %v444 = vpack.c.b16 %v399, %v398
      %v445 = vpack.c.b16 %v401, %v400
      %v446 = vpack.c.b16 %v403, %v402
      %v447 = vpack.c.b16 %v405, %v404
      %v448 = vpack.c.b16 %v407, %v406
      %v449 = vpack.c.b16 %v409, %v408
      %v450 = vpack.c.b16 %v411, %v410
      %v451 = vpack.c.b16 %v413, %v412
      %v452 = vpack.c.b16 %v415, %v414
      %v453 = vpack.c.b16 %v417, %v416
      %v454 = vpack.c.b16 %v419, %v418
      %v455 = vpack.c.b16 %v421, %v420
      %v456 = vpack.c.b16 %v423, %v422
      %v457 = vpack.c.b16 %v425, %v424
      %vm458 = vcmask 64512
      %v460 = vsel %vm458, %v426, 0
      %v463 = vsel %vm458, %v427, 0
      %v466 = vsel %vm458, %v428, 0
      %v469 = vsel %vm458, %v429, 0
      %v472 = vsel %vm458, %v430, 0
      %v475 = vsel %vm458, %v431, 0
      %v478 = vsel %vm458, %v432, 0
      %v481 = vsel %vm458, %v433, 0
      %v484 = vsel %vm458, %v434, 0
      %v487 = vsel %vm458, %v435, 0
      %v490 = vsel %vm458, %v436, 0
      %v493 = vsel %vm458, %v437, 0
      %v496 = vsel %vm458, %v438, 0
      %v499 = vsel %vm458, %v439, 0
      %v502 = vsel %vm458, %v440, 0
      %v505 = vsel %vm458, %v441, 0
      %v508 = vsel %vm458, %v442, 0
      %v511 = vsel %vm458, %v443, 0
      %v514 = vsel %vm458, %v444, 0
      %v517 = vsel %vm458, %v445, 0
      %v520 = vsel %vm458, %v446, 0
      %v523 = vsel %vm458, %v447, 0
      %v526 = vsel %vm458, %v448, 0
      %v529 = vsel %vm458, %v449, 0
      %v532 = vsel %vm458, %v450, 0
      %v535 = vsel %vm458, %v451, 0
      %v538 = vsel %vm458, %v452, 0
      %v541 = vsel %vm458, %v453, 0
      %v544 = vsel %vm458, %v454, 0
      %v547 = vsel %vm458, %v455, 0
      %v550 = vsel %vm458, %v456, 0
      %v553 = vsel %vm458, %v457, 0
      %vm555 = vcmask 1043456
      %v557 = vsel %vm555, %v290, 0
      %559 = vmatprep.subr.bf16.mxu0 0
      %560 = vmatpush1.bf16.msra.mxu0 %v557
      %561 = vmatprep.subr.bf16.mxu0 0
      %562 = vmatpush1.bf16.msra.mxu0 0
      %563 = vmatprep.subr.bf16.mxu0 0
      %564 = vmatpush1.bf16.msra.mxu0 0
      %565 = vmatprep.subr.bf16.mxu0 0
      %566 = vmatpush1.bf16.msra.mxu0 0
      %567 = vmatprep.subr.bf16.mxu0 0
      %568 = vmatpush1.bf16.msra.mxu0 0
      %569 = vmatprep.subr.bf16.mxu0 0
      %570 = vmatpush1.bf16.msra.mxu0 0
      %571 = vmatprep.subr.bf16.mxu0 0
      %572 = vmatpush1.bf16.msra.mxu0 0
      %573 = vmatprep.subr.bf16.mxu0 0
      %574 = vmatpush1.bf16.msra.mxu0 0
      %575 = vmatprep.subr.bf16.mxu0 0
      %576 = vmatpush1.bf16.msra.mxu0 0
      %577 = vmatprep.subr.bf16.mxu0 0
      %578 = vmatpush1.bf16.msra.mxu0 0
      %579 = vmatprep.subr.bf16.mxu0 0
      %580 = vmatpush1.bf16.msra.mxu0 0
      %581 = vmatprep.subr.bf16.mxu0 0
      %582 = vmatpush1.bf16.msra.mxu0 0
      %583 = vmatprep.subr.bf16.mxu0 0
      %584 = vmatpush1.bf16.msra.mxu0 0
      %585 = vmatprep.subr.bf16.mxu0 0
      %586 = vmatpush1.bf16.msra.mxu0 0
      %587 = vmatprep.subr.bf16.mxu0 0
      %588 = vmatpush1.bf16.msra.mxu0 0
      %589 = vmatprep.subr.bf16.mxu0 0
      %590 = vmatpush1.bf16.msra.mxu0 0
      %591 = vmatprep.mubr.bf16.mxu0 0
      %592 = vmatmul.mubr.bf16.gmra.mrb[0].mxu0 %v460
      %v593 = vpop.f32.mrb[0].mxu0
      %v594 = vadd.f32 %v296, %v593
      %v595 = vpop.f32.mrb[0].mxu0
      %v596 = vpop.f32.mrb[0].mxu0
      %v597 = vadd.f32 %v296, %v596
      %v598 = vpop.f32.mrb[0].mxu0
      %599 = vmatprep.mubr.bf16.mxu0 0
      %600 = vmatmul.mubr.bf16.gmra.mrb[0].mxu0 %v463
      %v601 = vpop.f32.mrb[0].mxu0
      %v602 = vadd.f32 %v296, %v601
      %v603 = vpop.f32.mrb[0].mxu0
      %v604 = vpop.f32.mrb[0].mxu0
      %v605 = vadd.f32 %v296, %v604
      %v606 = vpop.f32.mrb[0].mxu0
      %607 = vmatprep.mubr.bf16.mxu0 0
      %608 = vmatmul.mubr.bf16.gmra.mrb[0].mxu0 %v466
      %v609 = vpop.f32.mrb[0].mxu0
      %v610 = vadd.f32 %v296, %v609
      %v611 = vpop.f32.mrb[0].mxu0
      %v612 = vpop.f32.mrb[0].mxu0
      %v613 = vadd.f32 %v296, %v612
      %v614 = vpop.f32.mrb[0].mxu0
      %615 = vmatprep.mubr.bf16.mxu0 0
      %616 = vmatmul.mubr.bf16.gmra.mrb[0].mxu0 %v469
      %v617 = vpop.f32.mrb[0].mxu0
      %v618 = vadd.f32 %v296, %v617
      %v619 = vpop.f32.mrb[0].mxu0
      %v620 = vpop.f32.mrb[0].mxu0
      %v621 = vadd.f32 %v296, %v620
      %v622 = vpop.f32.mrb[0].mxu0
      %623 = vmatprep.mubr.bf16.mxu0 0
      %624 = vmatmul.mubr.bf16.gmra.mrb[0].mxu0 %v472
      %v625 = vpop.f32.mrb[0].mxu0
      %v626 = vadd.f32 %v296, %v625
      %v627 = vpop.f32.mrb[0].mxu0
      %v628 = vpop.f32.mrb[0].mxu0
      %v629 = vadd.f32 %v296, %v628
      %v630 = vpop.f32.mrb[0].mxu0
      %631 = vmatprep.mubr.bf16.mxu0 0
      %632 = vmatmul.mubr.bf16.gmra.mrb[0].mxu0 %v475
      %v633 = vpop.f32.mrb[0].mxu0
      %v634 = vadd.f32 %v296, %v633
      %v635 = vpop.f32.mrb[0].mxu0
      %v636 = vpop.f32.mrb[0].mxu0
      %v637 = vadd.f32 %v296, %v636
      %v638 = vpop.f32.mrb[0].mxu0
      %639 = vmatprep.mubr.bf16.mxu0 0
      %640 = vmatmul.mubr.bf16.gmra.mrb[0].mxu0 %v478
      %v641 = vpop.f32.mrb[0].mxu0
      %v642 = vadd.f32 %v296, %v641
      %v643 = vpop.f32.mrb[0].mxu0
      %v644 = vpop.f32.mrb[0].mxu0
      %v645 = vadd.f32 %v296, %v644
      %v646 = vpop.f32.mrb[0].mxu0
      %647 = vmatprep.mubr.bf16.mxu0 0
      %648 = vmatmul.mubr.bf16.gmra.mrb[0].mxu0 %v481
      %v649 = vpop.f32.mrb[0].mxu0
      %v650 = vadd.f32 %v296, %v649
      %v651 = vpop.f32.mrb[0].mxu0
      %v652 = vpop.f32.mrb[0].mxu0
      %v653 = vadd.f32 %v296, %v652
      %v654 = vpop.f32.mrb[0].mxu0
      %655 = vmatprep.mubr.bf16.mxu0 0
      %656 = vmatmul.mubr.bf16.gmra.mrb[0].mxu0 %v484
      %v657 = vpop.f32.mrb[0].mxu0
      %v658 = vadd.f32 %v296, %v657
      %v659 = vpop.f32.mrb[0].mxu0
      %v660 = vpop.f32.mrb[0].mxu0
      %v661 = vadd.f32 %v296, %v660
      %v662 = vpop.f32.mrb[0].mxu0
      %663 = vmatprep.mubr.bf16.mxu0 0
      %664 = vmatmul.mubr.bf16.gmra.mrb[0].mxu0 %v487
      %v665 = vpop.f32.mrb[0].mxu0
      %v666 = vadd.f32 %v296, %v665
      %v667 = vpop.f32.mrb[0].mxu0
      %v668 = vpop.f32.mrb[0].mxu0
      %v669 = vadd.f32 %v296, %v668
      %v670 = vpop.f32.mrb[0].mxu0
      %671 = vmatprep.mubr.bf16.mxu0 0
      %672 = vmatmul.mubr.bf16.gmra.mrb[0].mxu0 %v490
      %v673 = vpop.f32.mrb[0].mxu0
      %v674 = vadd.f32 %v296, %v673
      %v675 = vpop.f32.mrb[0].mxu0
      %v676 = vpop.f32.mrb[0].mxu0
      %v677 = vadd.f32 %v296, %v676
      %v678 = vpop.f32.mrb[0].mxu0
      %679 = vmatprep.mubr.bf16.mxu0 0
      %680 = vmatmul.mubr.bf16.gmra.mrb[0].mxu0 %v493
      %v681 = vpop.f32.mrb[0].mxu0
      %v682 = vadd.f32 %v296, %v681
      %v683 = vpop.f32.mrb[0].mxu0
      %v684 = vpop.f32.mrb[0].mxu0
      %v685 = vadd.f32 %v296, %v684
      %v686 = vpop.f32.mrb[0].mxu0
      %687 = vmatprep.mubr.bf16.mxu0 0
      %688 = vmatmul.mubr.bf16.gmra.mrb[0].mxu0 %v496
      %v689 = vpop.f32.mrb[0].mxu0
      %v690 = vadd.f32 %v296, %v689
      %v691 = vpop.f32.mrb[0].mxu0
      %v692 = vpop.f32.mrb[0].mxu0
      %v693 = vadd.f32 %v296, %v692
      %v694 = vpop.f32.mrb[0].mxu0
      %695 = vmatprep.mubr.bf16.mxu0 0
      %696 = vmatmul.mubr.bf16.gmra.mrb[0].mxu0 %v499
      %v697 = vpop.f32.mrb[0].mxu0
      %v698 = vadd.f32 %v296, %v697
      %v699 = vpop.f32.mrb[0].mxu0
      %v700 = vpop.f32.mrb[0].mxu0
      %v701 = vadd.f32 %v296, %v700
      %v702 = vpop.f32.mrb[0].mxu0
      %703 = vmatprep.mubr.bf16.mxu0 0
      %704 = vmatmul.mubr.bf16.gmra.mrb[0].mxu0 %v502
      %v705 = vpop.f32.mrb[0].mxu0
      %v706 = vadd.f32 %v296, %v705
      %v707 = vpop.f32.mrb[0].mxu0
      %v708 = vpop.f32.mrb[0].mxu0
      %v709 = vadd.f32 %v296, %v708
      %v710 = vpop.f32.mrb[0].mxu0
      %711 = vmatprep.mubr.bf16.mxu0 0
      %712 = vmatmul.mubr.bf16.gmra.mrb[0].mxu0 %v505
      %v713 = vpop.f32.mrb[0].mxu0
      %v714 = vadd.f32 %v296, %v713
      %v715 = vpop.f32.mrb[0].mxu0
      %v716 = vpop.f32.mrb[0].mxu0
      %v717 = vadd.f32 %v296, %v716
      %v718 = vpop.f32.mrb[0].mxu0
      %719 = vmatprep.mubr.bf16.mxu0 0
      %720 = vmatmul.mubr.bf16.gmra.mrb[0].mxu0 %v508
      %v721 = vpop.f32.mrb[0].mxu0
      %v722 = vadd.f32 %v296, %v721
      %v723 = vpop.f32.mrb[0].mxu0
      %v724 = vpop.f32.mrb[0].mxu0
      %v725 = vadd.f32 %v296, %v724
      %v726 = vpop.f32.mrb[0].mxu0
      %727 = vmatprep.mubr.bf16.mxu0 0
      %728 = vmatmul.mubr.bf16.gmra.mrb[0].mxu0 %v511
      %v729 = vpop.f32.mrb[0].mxu0
      %v730 = vadd.f32 %v296, %v729
      %v731 = vpop.f32.mrb[0].mxu0
      %v732 = vpop.f32.mrb[0].mxu0
      %v733 = vadd.f32 %v296, %v732
      %v734 = vpop.f32.mrb[0].mxu0
      %735 = vmatprep.mubr.bf16.mxu0 0
      %736 = vmatmul.mubr.bf16.gmra.mrb[0].mxu0 %v514
      %v737 = vpop.f32.mrb[0].mxu0
      %v738 = vadd.f32 %v296, %v737
      %v739 = vpop.f32.mrb[0].mxu0
      %v740 = vpop.f32.mrb[0].mxu0
      %v741 = vadd.f32 %v296, %v740
      %v742 = vpop.f32.mrb[0].mxu0
      %743 = vmatprep.mubr.bf16.mxu0 0
      %744 = vmatmul.mubr.bf16.gmra.mrb[0].mxu0 %v517
      %v745 = vpop.f32.mrb[0].mxu0
      %v746 = vadd.f32 %v296, %v745
      %v747 = vpop.f32.mrb[0].mxu0
      %v748 = vpop.f32.mrb[0].mxu0
      %v749 = vadd.f32 %v296, %v748
      %v750 = vpop.f32.mrb[0].mxu0
      %751 = vmatprep.mubr.bf16.mxu0 0
      %752 = vmatmul.mubr.bf16.gmra.mrb[0].mxu0 %v520
      %v753 = vpop.f32.mrb[0].mxu0
      %v754 = vadd.f32 %v296, %v753
      %v755 = vpop.f32.mrb[0].mxu0
      %v756 = vpop.f32.mrb[0].mxu0
      %v757 = vadd.f32 %v296, %v756
      %v758 = vpop.f32.mrb[0].mxu0
      %759 = vmatprep.mubr.bf16.mxu0 0
      %760 = vmatmul.mubr.bf16.gmra.mrb[0].mxu0 %v523
      %v761 = vpop.f32.mrb[0].mxu0
      %v762 = vadd.f32 %v296, %v761
      %v763 = vpop.f32.mrb[0].mxu0
      %v764 = vpop.f32.mrb[0].mxu0
      %v765 = vadd.f32 %v296, %v764
      %v766 = vpop.f32.mrb[0].mxu0
      %767 = vmatprep.mubr.bf16.mxu0 0
      %768 = vmatmul.mubr.bf16.gmra.mrb[0].mxu0 %v526
      %v769 = vpop.f32.mrb[0].mxu0
      %v770 = vadd.f32 %v296, %v769
      %v771 = vpop.f32.mrb[0].mxu0
      %v772 = vpop.f32.mrb[0].mxu0
      %v773 = vadd.f32 %v296, %v772
      %v774 = vpop.f32.mrb[0].mxu0
      %775 = vmatprep.mubr.bf16.mxu0 0
      %776 = vmatmul.mubr.bf16.gmra.mrb[0].mxu0 %v529
      %v777 = vpop.f32.mrb[0].mxu0
      %v778 = vadd.f32 %v296, %v777
      %v779 = vpop.f32.mrb[0].mxu0
      %v780 = vpop.f32.mrb[0].mxu0
      %v781 = vadd.f32 %v296, %v780
      %v782 = vpop.f32.mrb[0].mxu0
      %783 = vmatprep.mubr.bf16.mxu0 0
      %784 = vmatmul.mubr.bf16.gmra.mrb[0].mxu0 %v532
      %v785 = vpop.f32.mrb[0].mxu0
      %v786 = vadd.f32 %v296, %v785
      %v787 = vpop.f32.mrb[0].mxu0
      %v788 = vpop.f32.mrb[0].mxu0
      %v789 = vadd.f32 %v296, %v788
      %v790 = vpop.f32.mrb[0].mxu0
      %791 = vmatprep.mubr.bf16.mxu0 0
      %792 = vmatmul.mubr.bf16.gmra.mrb[0].mxu0 %v535
      %v793 = vpop.f32.mrb[0].mxu0
      %v794 = vadd.f32 %v296, %v793
      %v795 = vpop.f32.mrb[0].mxu0
      %v796 = vpop.f32.mrb[0].mxu0
      %v797 = vadd.f32 %v296, %v796
      %v798 = vpop.f32.mrb[0].mxu0
      %799 = vmatprep.mubr.bf16.mxu0 0
      %800 = vmatmul.mubr.bf16.gmra.mrb[0].mxu0 %v538
      %v801 = vpop.f32.mrb[0].mxu0
      %v802 = vadd.f32 %v296, %v801
      %v803 = vpop.f32.mrb[0].mxu0
      %v804 = vpop.f32.mrb[0].mxu0
      %v805 = vadd.f32 %v296, %v804
      %v806 = vpop.f32.mrb[0].mxu0
      %807 = vmatprep.mubr.bf16.mxu0 0
      %808 = vmatmul.mubr.bf16.gmra.mrb[0].mxu0 %v541
      %v809 = vpop.f32.mrb[0].mxu0
      %v810 = vadd.f32 %v296, %v809
      %v811 = vpop.f32.mrb[0].mxu0
      %v812 = vpop.f32.mrb[0].mxu0
      %v813 = vadd.f32 %v296, %v812
      %v814 = vpop.f32.mrb[0].mxu0
      %815 = vmatprep.mubr.bf16.mxu0 0
      %816 = vmatmul.mubr.bf16.gmra.mrb[0].mxu0 %v544
      %v817 = vpop.f32.mrb[0].mxu0
      %v818 = vadd.f32 %v296, %v817
      %v819 = vpop.f32.mrb[0].mxu0
      %v820 = vpop.f32.mrb[0].mxu0
      %v821 = vadd.f32 %v296, %v820
      %v822 = vpop.f32.mrb[0].mxu0
      %823 = vmatprep.mubr.bf16.mxu0 0
      %824 = vmatmul.mubr.bf16.gmra.mrb[0].mxu0 %v547
      %v825 = vpop.f32.mrb[0].mxu0
      %v826 = vadd.f32 %v296, %v825
      %v827 = vpop.f32.mrb[0].mxu0
      %v828 = vpop.f32.mrb[0].mxu0
      %v829 = vadd.f32 %v296, %v828
      %v830 = vpop.f32.mrb[0].mxu0
      %831 = vmatprep.mubr.bf16.mxu0 0
      %832 = vmatmul.mubr.bf16.gmra.mrb[0].mxu0 %v550
      %v833 = vpop.f32.mrb[0].mxu0
      %v834 = vadd.f32 %v296, %v833
      %v835 = vpop.f32.mrb[0].mxu0
      %v836 = vpop.f32.mrb[0].mxu0
      %v837 = vadd.f32 %v296, %v836
      %v838 = vpop.f32.mrb[0].mxu0
      %839 = vmatprep.mubr.bf16.mxu0 0
      %840 = vmatmul.mubr.bf16.gmra.mrb[0].mxu0 %v553
      %v841 = vpop.f32.mrb[0].mxu0
      %v842 = vadd.f32 %v296, %v841
      %v843 = vpop.f32.mrb[0].mxu0
      %v844 = vpop.f32.mrb[0].mxu0
      %v845 = vadd.f32 %v296, %v844
      %v846 = vpop.f32.mrb[0].mxu0
      %847 = vdwg.mxu0
      %848 = vst.msk [vmem:[%s223] sm:$0xff] %vm458, %v594
      %849 = vst.msk [vmem:[%s223 + $0x8] sm:$0xff] %vm458, %v597
      %850 = vst.msk [vmem:[%s223 + $0x10] sm:$0xff] %vm458, %v602
      %851 = vst.msk [vmem:[%s223 + $0x18] sm:$0xff] %vm458, %v605
      %852 = vst.msk [vmem:[%s223 + $0x20] sm:$0xff] %vm458, %v610
      %853 = vst.msk [vmem:[%s223 + $0x28] sm:$0xff] %vm458, %v613
      %854 = vst.msk [vmem:[%s223 + $0x30] sm:$0xff] %vm458, %v618
      %855 = vst.msk [vmem:[%s223 + $0x38] sm:$0xff] %vm458, %v621
      %856 = vst.msk [vmem:[%s223 + $0x40] sm:$0xff] %vm458, %v626
      %857 = vst.msk [vmem:[%s223 + $0x48] sm:$0xff] %vm458, %v629
      %858 = vst.msk [vmem:[%s223 + $0x50] sm:$0xff] %vm458, %v634
      %859 = vst.msk [vmem:[%s223 + $0x58] sm:$0xff] %vm458, %v637
      %860 = vst.msk [vmem:[%s223 + $0x60] sm:$0xff] %vm458, %v642
      %861 = vst.msk [vmem:[%s223 + $0x68] sm:$0xff] %vm458, %v645
      %862 = vst.msk [vmem:[%s223 + $0x70] sm:$0xff] %vm458, %v650
      %863 = vst.msk [vmem:[%s223 + $0x78] sm:$0xff] %vm458, %v653
      %864 = vst.msk [vmem:[%s223 + $0x80] sm:$0xff] %vm458, %v658
      %865 = vst.msk [vmem:[%s223 + $0x88] sm:$0xff] %vm458, %v661
      %866 = vst.msk [vmem:[%s223 + $0x90] sm:$0xff] %vm458, %v666
      %867 = vst.msk [vmem:[%s223 + $0x98] sm:$0xff] %vm458, %v669
      %868 = vst.msk [vmem:[%s223 + $0xa0] sm:$0xff] %vm458, %v674
      %869 = vst.msk [vmem:[%s223 + $0xa8] sm:$0xff] %vm458, %v677
      %870 = vst.msk [vmem:[%s223 + $0xb0] sm:$0xff] %vm458, %v682
      %871 = vst.msk [vmem:[%s223 + $0xb8] sm:$0xff] %vm458, %v685
      %872 = vst.msk [vmem:[%s223 + $0xc0] sm:$0xff] %vm458, %v690
      %873 = vst.msk [vmem:[%s223 + $0xc8] sm:$0xff] %vm458, %v693
      %874 = vst.msk [vmem:[%s223 + $0xd0] sm:$0xff] %vm458, %v698
      %875 = vst.msk [vmem:[%s223 + $0xd8] sm:$0xff] %vm458, %v701
      %876 = vst.msk [vmem:[%s223 + $0xe0] sm:$0xff] %vm458, %v706
      %877 = vst.msk [vmem:[%s223 + $0xe8] sm:$0xff] %vm458, %v709
      %878 = vst.msk [vmem:[%s223 + $0xf0] sm:$0xff] %vm458, %v714
      %879 = vst.msk [vmem:[%s223 + $0xf8] sm:$0xff] %vm458, %v717
      %880 = vst.msk [vmem:[%s223 + $0x100] sm:$0xff] %vm458, %v722
      %881 = vst.msk [vmem:[%s223 + $0x108] sm:$0xff] %vm458, %v725
      %882 = vst.msk [vmem:[%s223 + $0x110] sm:$0xff] %vm458, %v730
      %883 = vst.msk [vmem:[%s223 + $0x118] sm:$0xff] %vm458, %v733
      %884 = vst.msk [vmem:[%s223 + $0x120] sm:$0xff] %vm458, %v738
      %885 = vst.msk [vmem:[%s223 + $0x128] sm:$0xff] %vm458, %v741
      %886 = vst.msk [vmem:[%s223 + $0x130] sm:$0xff] %vm458, %v746
      %887 = vst.msk [vmem:[%s223 + $0x138] sm:$0xff] %vm458, %v749
      %888 = vst.msk [vmem:[%s223 + $0x140] sm:$0xff] %vm458, %v754
      %889 = vst.msk [vmem:[%s223 + $0x148] sm:$0xff] %vm458, %v757
      %890 = vst.msk [vmem:[%s223 + $0x150] sm:$0xff] %vm458, %v762
      %891 = vst.msk [vmem:[%s223 + $0x158] sm:$0xff] %vm458, %v765
      %892 = vst.msk [vmem:[%s223 + $0x160] sm:$0xff] %vm458, %v770
      %893 = vst.msk [vmem:[%s223 + $0x168] sm:$0xff] %vm458, %v773
      %894 = vst.msk [vmem:[%s223 + $0x170] sm:$0xff] %vm458, %v778
      %895 = vst.msk [vmem:[%s223 + $0x178] sm:$0xff] %vm458, %v781
      %896 = vst.msk [vmem:[%s223 + $0x180] sm:$0xff] %vm458, %v786
      %897 = vst.msk [vmem:[%s223 + $0x188] sm:$0xff] %vm458, %v789
      %898 = vst.msk [vmem:[%s223 + $0x190] sm:$0xff] %vm458, %v794
      %899 = vst.msk [vmem:[%s223 + $0x198] sm:$0xff] %vm458, %v797
      %900 = vst.msk [vmem:[%s223 + $0x1a0] sm:$0xff] %vm458, %v802
      %901 = vst.msk [vmem:[%s223 + $0x1a8] sm:$0xff] %vm458, %v805
      %902 = vst.msk [vmem:[%s223 + $0x1b0] sm:$0xff] %vm458, %v810
      %903 = vst.msk [vmem:[%s223 + $0x1b8] sm:$0xff] %vm458, %v813
      %904 = vst.msk [vmem:[%s223 + $0x1c0] sm:$0xff] %vm458, %v818
      %905 = vst.msk [vmem:[%s223 + $0x1c8] sm:$0xff] %vm458, %v821
      %906 = vst.msk [vmem:[%s223 + $0x1d0] sm:$0xff] %vm458, %v826
      %907 = vst.msk [vmem:[%s223 + $0x1d8] sm:$0xff] %vm458, %v829
      %908 = vst.msk [vmem:[%s223 + $0x1e0] sm:$0xff] %vm458, %v834
      %909 = vst.msk [vmem:[%s223 + $0x1e8] sm:$0xff] %vm458, %v837
      %910 = vst.msk [vmem:[%s223 + $0x1f0] sm:$0xff] %vm458, %v842
      %911 = vst.msk [vmem:[%s223 + $0x1f8] sm:$0xff] %vm458, %v845
      %s912 = smul.u32 64, %s18
      %p913 = scmp.lt.s32.totalorder %s912, 2047
      %s914 = scalar_select %p913, %s912, 2047
      %p915 = scmp.lt.s32.totalorder %s19, 0
      %s916 = scalar_select %p915, %s19, 0
      %s917 = sadd.s32 %s916, %s914
      %s918 = smul.addr %s917, 8
      %s919 = scalar_lea.vmem %s3, %s918
      // Predicated region
      $region33: #{_conv2d_impl.1} parent=31 // pred_check
        %p920 = pneg %p124
      $region34: #{_conv2d_impl.1} parent=31 // pred_check_branch
        %922 = sbr.rel (%p920) target = $region36
      $region35: #{_conv2d_impl.1} parent=31 // pred_region
        %s923 = smul.u32 64, %s18
      $region36: #{_conv2d_impl.1} parent=31 // pred_fallthru
        _
    $region32: #{_conv2d_impl.1} parent=5 // pred_fallthru
      _
    %p924 = scmp.le.s32.totalorder 2, %s9
    // Predicated region
    $region37: #{_conv2d_impl.1} parent=5 // pred_check
      %p925 = pneg %p924
    $region38: #{_conv2d_impl.1} parent=5 // pred_check_branch
      %927 = sbr.rel (%p925) target = $region40
    $region39: #{_conv2d_impl.1} parent=5 // pred_region
      %s928 = ssub.s32 %s9, 2
      // Predicated region
      $region41: #{_conv2d_impl.1} parent=39 // pred_check
        %p929 = pneg %p130
      $region42: #{_conv2d_impl.1} parent=39 // pred_check_branch
        %931 = sbr.rel (%p929) target = $region44
      $region43: #{_conv2d_impl.1} parent=39 // pred_region
        %s932 = smul.u32 64, %s20
        %p933 = scmp.lt.s32.totalorder %s932, 2047
        %s934 = scalar_select %p933, %s932, 2047
        %p935 = scmp.lt.s32.totalorder %s21, 0
        %s936 = scalar_select %p935, %s21, 0
        %s937 = sadd.s32 %s936, %s934
        %s938 = smul.addr %s937, 8
        %s939 = scalar_lea.vmem %s3, %s938
      $region44: #{_conv2d_impl.1} parent=39 // pred_fallthru
        _
    $region40: #{_conv2d_impl.1} parent=5 // pred_fallthru
      _
  $region6: #{_conv2d_impl.1} parent=0 // loop_footer
    %s13 = sadd.s32 1, %s9
  $region7: #{_conv2d_impl.1} parent=0 // loop_footer_branch
    %8 = sbr.rel target = $region3
  $region8: #{_conv2d_impl.1} parent=0 // loop_exit
    _

</llo_original>
